<compile_context>
chip_gen: v7x
topology: tpu7x:2x2x1
jax: 0.10.0
libtpu: 0.0.40
codegen_flags: <defaults>
</compile_context>

<pallas_src>
import functools

import jax
import jax.numpy as jnp
import numpy as np
from jax.experimental import pallas as pl
from jax.experimental.pallas import tpu as pltpu

EPS = 1e-5  # PyTorch GroupNorm default eps


# ---------------------------------------------------------------------------
# Fused Pallas kernel: Conv3x3 -> GN -> ReLU -> Conv3x3 -> GN -> (+res) -> ReLU
# ---------------------------------------------------------------------------
def upblock_doubleconv_kernel(xpad_ref, mask_ref,
                              w1_ref, g1_ref, b1_ref,
                              w2_ref, g2_ref, b2_ref, wres_ref,
                              o_ref, hpad_ref, *, Ho, Wo, Wp):
    """One (upsampled, concatenated, zero-padded) sample per grid step.

    xpad_ref : (1, Cin, Hp*Wp) bf16   Hp = Ho+3 (pad top1/bot2), Wp = Wo+2 (pad l/r)
    mask_ref : (1, Ho*Wp)      f32    1.0 on the Wo valid columns of each wide row
    w1_ref   : (Cout, 9*Cin)   bf16   folded 3x3 taps
    w2_ref   : (Cout, 9*Cout)  bf16
    wres_ref : (Cout, Cin)     bf16   1x1 residual conv
    g*/b*    : (Cout, 1)       f32    GroupNorm(1, C) affine
    o_ref    : (1, Cout, Ho*Wp) f32   "wide" output (2 junk cols/row, sliced outside)
    hpad_ref : (Cout, Hp*Wp)   bf16   VMEM scratch: re-padded conv1 activation
    """
    Cout = o_ref.shape[1]
    HWw = Ho * Wp                       # wide (padded-width) spatial extent

    x = xpad_ref[0]                     # (Cin, Hp*Wp) bf16, resident in VMEM
    valid = mask_ref[...]               # (1, HWw) f32
    inv_cnt = 1.0 / float(Cout * Ho * Wo)

    def conv3x3(src, wf_ref):
        # 9 shifted flat views of the zero-padded input, folded into a single
        # (Cout, 9*C) x (9*C, HWw) MXU contraction.
        taps = jnp.concatenate(
            [src[:, dy * Wp + dx: dy * Wp + dx + HWw]
             for dy in range(3) for dx in range(3)], axis=0)
        return jnp.dot(wf_ref[...], taps, preferred_element_type=jnp.float32)

    def group_norm(acc, g_ref, b_ref):
        # GroupNorm(num_groups=1): single-pass masked stats over C*Ho*Wo, f32.
        s = jnp.sum(acc * valid) * inv_cnt
        ss = jnp.sum(acc * acc * valid) * inv_cnt
        var = ss - s * s
        return (acc - s) * jax.lax.rsqrt(var + EPS) * g_ref[...] + b_ref[...]

    # conv1 (3x3, no bias) -> GN -> ReLU; junk/pad columns zeroed by the mask.
    acc1 = conv3x3(x, w1_ref)                                    # (Cout, HWw) f32
    h = jnp.maximum(group_norm(acc1, g1_ref, b1_ref), 0.0) * valid

    # Re-pad h inside VMEM so conv2 sees the same flat zero-padded layout.
    hpad_ref[...] = jnp.zeros_like(hpad_ref)
    hpad_ref[:, Wp + 1: Wp + 1 + HWw] = h.astype(hpad_ref.dtype)

    # conv2 -> GN -> (dropout == identity in eval) ; + residual 1x1 ; ReLU.
    # TODO(synk): dropout_m(p=dropout_p) is treated as eval-mode identity.
    acc2 = conv3x3(hpad_ref[...], w2_ref)
    y = group_norm(acc2, g2_ref, b2_ref)
    # NOTE: when in_ch == out_ch the PyTorch residual is Identity; wres is then an
    # identity matrix and this matmul could be skipped.
    res = jnp.dot(wres_ref[...], x[:, Wp + 1: Wp + 1 + HWw],
                  preferred_element_type=jnp.float32)
    o_ref[0] = jnp.maximum(y + res, 0.0).astype(o_ref.dtype)


# ---------------------------------------------------------------------------
# Wrapper: concat + nearest-2x upsample + flat zero-pad, then one pallas_call
# ---------------------------------------------------------------------------
@jax.jit
def up_block_forward(attn, x, params):
    """attn, x: NCHW float32. Returns NCHW float32 (matches PyTorch UpBlock)."""
    # TODO(synk): the 2x nearest repeat stays in XLA (in-kernel lane interleave is
    # not worth the relayout at these sizes); everything downstream is fused.
    xin = jnp.concatenate([attn, x], axis=1)                    # (N, Cin, H, W)
    xin = jnp.repeat(jnp.repeat(xin, 2, axis=2), 2, axis=3)     # (N, Cin, Ho, Wo)
    N, Cin, Ho, Wo = xin.shape
    Cout = params["g1"].shape[0]
    Wp, Hp = Wo + 2, Ho + 3
    HWw = Ho * Wp

    # Zero pad top/left/right by 1 and bottom by 2 so every shifted 3x3 tap is a
    # contiguous lane-slice of the flattened (Hp*Wp) spatial axis.
    xpad = jnp.pad(xin, ((0, 0), (0, 0), (1, 2), (1, 1)))
    xpad = xpad.reshape(N, Cin, Hp * Wp).astype(jnp.bfloat16)

    # Validity mask of the "wide" (Ho, Wp) output grid: the last 2 columns of each
    # row are junk from the flat-shift trick and are excluded from GN stats.
    col = jnp.arange(HWw, dtype=jnp.int32) % Wp
    mask = (col < Wo).astype(jnp.float32).reshape(1, HWw)

    kernel = functools.partial(upblock_doubleconv_kernel, Ho=Ho, Wo=Wo, Wp=Wp)

    flops = 2 * N * HWw * (9 * Cin * Cout + 9 * Cout * Cout + Cin * Cout)
    bytes_accessed = (xpad.size * 2 + mask.size * 4
                      + params["w1f"].size * 2 + params["w2f"].size * 2
                      + params["wres"].size * 2 + 4 * Cout * 4
                      + N * Cout * HWw * 4)

    out_wide = pl.pallas_call(
        kernel,
        out_shape=jax.ShapeDtypeStruct((N, Cout, HWw), jnp.float32),
        grid_spec=pltpu.PrefetchScalarGridSpec(
            num_scalar_prefetch=0,
            grid=(N,),                                   # one sample per grid step
            in_specs=[
                pl.BlockSpec((1, Cin, Hp * Wp), lambda n: (n, 0, 0)),
                pl.BlockSpec((1, HWw), lambda n: (0, 0)),
                pl.BlockSpec((Cout, 9 * Cin), lambda n: (0, 0)),
                pl.BlockSpec((Cout, 1), lambda n: (0, 0)),
                pl.BlockSpec((Cout, 1), lambda n: (0, 0)),
                pl.BlockSpec((Cout, 9 * Cout), lambda n: (0, 0)),
                pl.BlockSpec((Cout, 1), lambda n: (0, 0)),
                pl.BlockSpec((Cout, 1), lambda n: (0, 0)),
                pl.BlockSpec((Cout, Cin), lambda n: (0, 0)),
            ],
            out_specs=pl.BlockSpec((1, Cout, HWw), lambda n: (n, 0, 0)),
            scratch_shapes=[pltpu.VMEM((Cout, Hp * Wp), jnp.bfloat16)],
        ),
        compiler_params=pltpu.CompilerParams(
            dimension_semantics=("parallel",),
            vmem_limit_bytes=48 * 1024 * 1024),
        cost_estimate=pl.CostEstimate(
            flops=int(flops), transcendentals=2 * int(N),
            bytes_accessed=int(bytes_accessed)),
    )(xpad, mask, params["w1f"], params["g1"], params["b1"],
      params["w2f"], params["g2"], params["b2"], params["wres"])

    # Drop the 2 junk columns per wide row; output is already NCHW.
    return out_wide.reshape(N, Cout, Ho, Wp)[:, :, :, :Wo]


# ---------------------------------------------------------------------------
# Deterministic parameter init (shapes implied by the PyTorch module)
# ---------------------------------------------------------------------------
def init_params(key, in_ch, out_ch):
    k = jax.random.split(key, 7)
    w1_oihw = 0.1 * jax.random.normal(k[0], (out_ch, in_ch, 3, 3), jnp.float32)
    w2_oihw = 0.1 * jax.random.normal(k[1], (out_ch, out_ch, 3, 3), jnp.float32)
    if in_ch != out_ch:
        wres_oihw = 0.1 * jax.random.normal(
            k[2], (out_ch, in_ch, 1, 1), jnp.float32)
    else:  # residual_conv is nn.Identity() -> identity matrix is equivalent
        wres_oihw = jnp.eye(out_ch, dtype=jnp.float32)[:, :, None, None]
    g1 = 1.0 + 0.05 * jax.random.normal(k[3], (out_ch, 1), jnp.float32)
    b1 = 0.05 * jax.random.normal(k[4], (out_ch, 1), jnp.float32)
    g2 = 1.0 + 0.05 * jax.random.normal(k[5], (out_ch, 1), jnp.float32)
    b2 = 0.05 * jax.random.normal(k[6], (out_ch, 1), jnp.float32)
    # Folded kernel layouts: column index = (dy*3+dx)*Cin + ci  (matches in-kernel
    # tap concatenation order).
    w1f = jnp.transpose(w1_oihw, (0, 2, 3, 1)).reshape(out_ch, 9 * in_ch)
    w2f = jnp.transpose(w2_oihw, (0, 2, 3, 1)).reshape(out_ch, 9 * out_ch)
    wres = wres_oihw[:, :, 0, 0]                       # (Cout, Cin)
    return dict(
        w1f=w1f.astype(jnp.bfloat16), w2f=w2f.astype(jnp.bfloat16),
        wres=wres.astype(jnp.bfloat16),
        g1=g1, b1=b1, g2=g2, b2=b2,
        # PyTorch layouts (for the reference check)
        w1_oihw=w1_oihw, w2_oihw=w2_oihw, wres_oihw=wres_oihw,
    )


# ---------------------------------------------------------------------------
# Pure-JAX f32 reference (mirrors PyTorch eval-mode semantics)
# ---------------------------------------------------------------------------
def reference(attn, x, p):
    xin = jnp.concatenate([attn, x], axis=1)
    xin = jnp.repeat(jnp.repeat(xin, 2, axis=2), 2, axis=3)

    def conv(z, w, pad):
        return jax.lax.conv_general_dilated(
            z, w, (1, 1), ((pad, pad), (pad, pad)),
            dimension_numbers=("NCHW", "OIHW", "NCHW"),
            precision=jax.lax.Precision.HIGHEST)

    def gn(z, g, b):
        m = jnp.mean(z, axis=(1, 2, 3), keepdims=True)
        v = jnp.mean((z - m) ** 2, axis=(1, 2, 3), keepdims=True)
        zn = (z - m) * jax.lax.rsqrt(v + EPS)
        return zn * g[None, :, None, None] + b[None, :, None, None]

    h = jnp.maximum(gn(conv(xin, p["w1_oihw"], 1), p["g1"][:, 0], p["b1"][:, 0]), 0.0)
    y = gn(conv(h, p["w2_oihw"], 1), p["g2"][:, 0], p["b2"][:, 0])
    res = conv(xin, p["wres_oihw"], 0)
    return jnp.maximum(y + res, 0.0)


if __name__ == "__main__":
    key = jax.random.PRNGKey(0)
    k_attn, k_x, k_p = jax.random.split(key, 3)

    # UpBlock(in_ch_x=4, in_ch_g=4, out_ch=16), spatial 8x8 -> 16x16
    N, in_ch_x, in_ch_g, out_ch, H, W = 2, 4, 4, 16, 8, 8
    attn = jax.random.normal(k_attn, (N, in_ch_g, H, W), jnp.float32)
    x = jax.random.normal(k_x, (N, in_ch_x, H, W), jnp.float32)
    params = init_params(k_p, in_ch_x + in_ch_g, out_ch)

    out = up_block_forward(attn, x, params)
    out = jax.block_until_ready(out)
    assert out.shape == (N, out_ch, 2 * H, 2 * W), out.shape

    ref = reference(attn, x, params)
    # bf16 matmul inputs (f32 accumulation / GN stats) -> relaxed tolerance.
    np.testing.assert_allclose(np.asarray(out), np.asarray(ref),
                               rtol=2e-2, atol=2e-2)
    print("KERNEL_OK")
</pallas_src>

<mosaic_0001>
module attributes {stable_mosaic.version = 11 : i64} {
  func.func @upblock_doubleconv_kernel(%arg0: i32, %arg1: memref<1x8x342xbf16, #tpu.memory_space<vmem>>, %arg2: memref<1x288xf32, #tpu.memory_space<vmem>>, %arg3: memref<16x72xbf16, #tpu.memory_space<vmem>>, %arg4: memref<16x1xf32, #tpu.memory_space<vmem>>, %arg5: memref<16x1xf32, #tpu.memory_space<vmem>>, %arg6: memref<16x144xbf16, #tpu.memory_space<vmem>>, %arg7: memref<16x1xf32, #tpu.memory_space<vmem>>, %arg8: memref<16x1xf32, #tpu.memory_space<vmem>>, %arg9: memref<16x8xbf16, #tpu.memory_space<vmem>>, %arg10: memref<1x16x288xf32, #tpu.memory_space<vmem>>, %arg11: memref<16x342xbf16, #tpu.memory_space<vmem>>) attributes {dimension_semantics = [#tpu.dimension_semantics<parallel>], iteration_bounds = array<i64: 2>, scalar_prefetch = 0 : i64, scratch_operands = 1 : i64, tpu.core_type = #tpu.core_type<tc>, window_params = [{transform_indices = @transform_0, window_bounds = array<i64: 1, 8, 342>}, {pipeline_mode = #tpu.pipeline_mode<synchronous>, transform_indices = @transform_1, window_bounds = array<i64: 1, 288>}, {pipeline_mode = #tpu.pipeline_mode<synchronous>, transform_indices = @transform_2, window_bounds = array<i64: 16, 72>}, {pipeline_mode = #tpu.pipeline_mode<synchronous>, transform_indices = @transform_3, window_bounds = array<i64: 16, 1>}, {pipeline_mode = #tpu.pipeline_mode<synchronous>, transform_indices = @transform_4, window_bounds = array<i64: 16, 1>}, {pipeline_mode = #tpu.pipeline_mode<synchronous>, transform_indices = @transform_5, window_bounds = array<i64: 16, 144>}, {pipeline_mode = #tpu.pipeline_mode<synchronous>, transform_indices = @transform_6, window_bounds = array<i64: 16, 1>}, {pipeline_mode = #tpu.pipeline_mode<synchronous>, transform_indices = @transform_7, window_bounds = array<i64: 16, 1>}, {pipeline_mode = #tpu.pipeline_mode<synchronous>, transform_indices = @transform_8, window_bounds = array<i64: 16, 8>}, {transform_indices = @transform_9, window_bounds = array<i64: 1, 16, 288>}]} {
    %c0 = arith.constant 0 : index
    %c0_0 = arith.constant 0 : index
    %c0_1 = arith.constant 0 : index
    %0 = vector.load %arg1[%c0, %c0_0, %c0_1] : memref<1x8x342xbf16, #tpu.memory_space<vmem>>, vector<1x8x342xbf16>
    %1 = vector.shape_cast %0 : vector<1x8x342xbf16> to vector<8x342xbf16>
    %c0_2 = arith.constant 0 : index
    %c0_3 = arith.constant 0 : index
    %2 = vector.load %arg2[%c0_2, %c0_3] : memref<1x288xf32, #tpu.memory_space<vmem>>, vector<1x288xf32>
    %3 = vector.extract_strided_slice %1 {offsets = [0, 0], sizes = [8, 288], strides = [1, 1]} : vector<8x342xbf16> to vector<8x288xbf16>
    %4 = vector.extract_strided_slice %1 {offsets = [0, 1], sizes = [8, 288], strides = [1, 1]} : vector<8x342xbf16> to vector<8x288xbf16>
    %5 = vector.extract_strided_slice %1 {offsets = [0, 2], sizes = [8, 288], strides = [1, 1]} : vector<8x342xbf16> to vector<8x288xbf16>
    %6 = vector.extract_strided_slice %1 {offsets = [0, 18], sizes = [8, 288], strides = [1, 1]} : vector<8x342xbf16> to vector<8x288xbf16>
    %7 = vector.extract_strided_slice %1 {offsets = [0, 19], sizes = [8, 288], strides = [1, 1]} : vector<8x342xbf16> to vector<8x288xbf16>
    %8 = vector.extract_strided_slice %1 {offsets = [0, 20], sizes = [8, 288], strides = [1, 1]} : vector<8x342xbf16> to vector<8x288xbf16>
    %9 = vector.extract_strided_slice %1 {offsets = [0, 36], sizes = [8, 288], strides = [1, 1]} : vector<8x342xbf16> to vector<8x288xbf16>
    %10 = vector.extract_strided_slice %1 {offsets = [0, 37], sizes = [8, 288], strides = [1, 1]} : vector<8x342xbf16> to vector<8x288xbf16>
    %11 = vector.extract_strided_slice %1 {offsets = [0, 38], sizes = [8, 288], strides = [1, 1]} : vector<8x342xbf16> to vector<8x288xbf16>
    %12 = tpu.concatenate %3, %4, %5, %6, %7, %8, %9, %10, %11 in 0 : vector<8x288xbf16>, vector<8x288xbf16>, vector<8x288xbf16>, vector<8x288xbf16>, vector<8x288xbf16>, vector<8x288xbf16>, vector<8x288xbf16>, vector<8x288xbf16>, vector<8x288xbf16> -> vector<72x288xbf16>
    %c0_4 = arith.constant 0 : index
    %c0_5 = arith.constant 0 : index
    %13 = vector.load %arg3[%c0_4, %c0_5] : memref<16x72xbf16, #tpu.memory_space<vmem>>, vector<16x72xbf16>
    %cst = arith.constant dense<0.000000e+00> : vector<16x288xf32>
    %14 = tpu.matmul %13, %12, %cst {dimension_numbers = #tpu.dot_dimension_numbers<[1], [0], [0], [1], [0, 0, 1, 1], [], []>} : vector<16x72xbf16>, vector<72x288xbf16>, vector<16x288xf32> -> vector<16x288xf32>
    %15 = vector.broadcast %2 : vector<1x288xf32> to vector<16x288xf32>
    %16 = arith.mulf %14, %15 : vector<16x288xf32>
    %17 = vector.shape_cast %16 : vector<16x288xf32> to vector<1x16x288xf32>
    %cst_6 = arith.constant dense<0.000000e+00> : vector<1xf32>
    %18 = vector.multi_reduction <add>, %17, %cst_6 [1, 2] : vector<1x16x288xf32> to vector<1xf32>
    %19 = vector.shape_cast %18 : vector<1xf32> to vector<1x1x1xf32>
    %20 = vector.extract %19[0, 0, 0] : f32 from vector<1x1x1xf32>
    %cst_7 = arith.constant 2.44140625E-4 : f32
    %21 = arith.mulf %20, %cst_7 : f32
    %22 = arith.mulf %14, %14 : vector<16x288xf32>
    %23 = vector.broadcast %2 : vector<1x288xf32> to vector<16x288xf32>
    %24 = arith.mulf %22, %23 : vector<16x288xf32>
    %25 = vector.shape_cast %24 : vector<16x288xf32> to vector<1x16x288xf32>
    %cst_8 = arith.constant dense<0.000000e+00> : vector<1xf32>
    %26 = vector.multi_reduction <add>, %25, %cst_8 [1, 2] : vector<1x16x288xf32> to vector<1xf32>
    %27 = vector.shape_cast %26 : vector<1xf32> to vector<1x1x1xf32>
    %28 = vector.extract %27[0, 0, 0] : f32 from vector<1x1x1xf32>
    %cst_9 = arith.constant 2.44140625E-4 : f32
    %29 = arith.mulf %28, %cst_9 : f32
    %30 = arith.mulf %21, %21 : f32
    %31 = arith.subf %29, %30 : f32
    %32 = vector.broadcast %21 : f32 to vector<16x288xf32>
    %33 = arith.subf %14, %32 : vector<16x288xf32>
    %cst_10 = arith.constant 9.99999974E-6 : f32
    %34 = arith.addf %31, %cst_10 : f32
    %35 = math.rsqrt %34 : f32
    %36 = vector.broadcast %35 : f32 to vector<16x288xf32>
    %37 = arith.mulf %33, %36 : vector<16x288xf32>
    %c0_11 = arith.constant 0 : index
    %c0_12 = arith.constant 0 : index
    %38 = vector.load %arg4[%c0_11, %c0_12] : memref<16x1xf32, #tpu.memory_space<vmem>>, vector<16x1xf32>
    %39 = vector.broadcast %38 : vector<16x1xf32> to vector<16x288xf32>
    %40 = arith.mulf %37, %39 : vector<16x288xf32>
    %c0_13 = arith.constant 0 : index
    %c0_14 = arith.constant 0 : index
    %41 = vector.load %arg5[%c0_13, %c0_14] : memref<16x1xf32, #tpu.memory_space<vmem>>, vector<16x1xf32>
    %42 = vector.broadcast %41 : vector<16x1xf32> to vector<16x288xf32>
    %43 = arith.addf %40, %42 : vector<16x288xf32>
    %cst_15 = arith.constant 0.000000e+00 : f32
    %44 = vector.broadcast %cst_15 : f32 to vector<16x288xf32>
    %45 = arith.maximumf %43, %44 : vector<16x288xf32>
    %46 = vector.broadcast %2 : vector<1x288xf32> to vector<16x288xf32>
    %47 = arith.mulf %45, %46 : vector<16x288xf32>
    %cst_16 = arith.constant 0.000000e+00 : bf16
    %48 = vector.broadcast %cst_16 : bf16 to vector<16x342xbf16>
    %c0_17 = arith.constant 0 : index
    %c0_18 = arith.constant 0 : index
    %49 = vector.load %arg11[%c0_17, %c0_18] : memref<16x342xbf16, #tpu.memory_space<vmem>>, vector<16x342xbf16>
    tpu.vector_store %arg11[%c0_17, %c0_18], %48 {strides = array<i32>} : memref<16x342xbf16, #tpu.memory_space<vmem>>, vector<16x342xbf16>,
    %50 = arith.truncf %47 : vector<16x288xf32> to vector<16x288xbf16>
    %c0_19 = arith.constant 0 : index
    %c19 = arith.constant 19 : index
    %51 = vector.load %arg11[%c0_19, %c19] : memref<16x342xbf16, #tpu.memory_space<vmem>>, vector<16x288xbf16>
    tpu.vector_store %arg11[%c0_19, %c19], %50 {strides = array<i32>} : memref<16x342xbf16, #tpu.memory_space<vmem>>, vector<16x288xbf16>,
    %c0_20 = arith.constant 0 : index
    %c0_21 = arith.constant 0 : index
    %52 = vector.load %arg11[%c0_20, %c0_21] : memref<16x342xbf16, #tpu.memory_space<vmem>>, vector<16x342xbf16>
    %53 = vector.extract_strided_slice %52 {offsets = [0, 0], sizes = [16, 288], strides = [1, 1]} : vector<16x342xbf16> to vector<16x288xbf16>
    %54 = vector.extract_strided_slice %52 {offsets = [0, 1], sizes = [16, 288], strides = [1, 1]} : vector<16x342xbf16> to vector<16x288xbf16>
    %55 = vector.extract_strided_slice %52 {offsets = [0, 2], sizes = [16, 288], strides = [1, 1]} : vector<16x342xbf16> to vector<16x288xbf16>
    %56 = vector.extract_strided_slice %52 {offsets = [0, 18], sizes = [16, 288], strides = [1, 1]} : vector<16x342xbf16> to vector<16x288xbf16>
    %57 = vector.extract_strided_slice %52 {offsets = [0, 19], sizes = [16, 288], strides = [1, 1]} : vector<16x342xbf16> to vector<16x288xbf16>
    %58 = vector.extract_strided_slice %52 {offsets = [0, 20], sizes = [16, 288], strides = [1, 1]} : vector<16x342xbf16> to vector<16x288xbf16>
    %59 = vector.extract_strided_slice %52 {offsets = [0, 36], sizes = [16, 288], strides = [1, 1]} : vector<16x342xbf16> to vector<16x288xbf16>
    %60 = vector.extract_strided_slice %52 {offsets = [0, 37], sizes = [16, 288], strides = [1, 1]} : vector<16x342xbf16> to vector<16x288xbf16>
    %61 = vector.extract_strided_slice %52 {offsets = [0, 38], sizes = [16, 288], strides = [1, 1]} : vector<16x342xbf16> to vector<16x288xbf16>
    %62 = tpu.concatenate %53, %54, %55, %56, %57, %58, %59, %60, %61 in 0 : vector<16x288xbf16>, vector<16x288xbf16>, vector<16x288xbf16>, vector<16x288xbf16>, vector<16x288xbf16>, vector<16x288xbf16>, vector<16x288xbf16>, vector<16x288xbf16>, vector<16x288xbf16> -> vector<144x288xbf16>
    %c0_22 = arith.constant 0 : index
    %c0_23 = arith.constant 0 : index
    %63 = vector.load %arg6[%c0_22, %c0_23] : memref<16x144xbf16, #tpu.memory_space<vmem>>, vector<16x144xbf16>
    %cst_24 = arith.constant dense<0.000000e+00> : vector<16x288xf32>
    %64 = tpu.matmul %63, %62, %cst_24 {dimension_numbers = #tpu.dot_dimension_numbers<[1], [0], [0], [1], [0, 0, 1, 1], [], []>} : vector<16x144xbf16>, vector<144x288xbf16>, vector<16x288xf32> -> vector<16x288xf32>
    %65 = vector.broadcast %2 : vector<1x288xf32> to vector<16x288xf32>
    %66 = arith.mulf %64, %65 : vector<16x288xf32>
    %67 = vector.shape_cast %66 : vector<16x288xf32> to vector<1x16x288xf32>
    %cst_25 = arith.constant dense<0.000000e+00> : vector<1xf32>
    %68 = vector.multi_reduction <add>, %67, %cst_25 [1, 2] : vector<1x16x288xf32> to vector<1xf32>
    %69 = vector.shape_cast %68 : vector<1xf32> to vector<1x1x1xf32>
    %70 = vector.extract %69[0, 0, 0] : f32 from vector<1x1x1xf32>
    %cst_26 = arith.constant 2.44140625E-4 : f32
    %71 = arith.mulf %70, %cst_26 : f32
    %72 = arith.mulf %64, %64 : vector<16x288xf32>
    %73 = vector.broadcast %2 : vector<1x288xf32> to vector<16x288xf32>
    %74 = arith.mulf %72, %73 : vector<16x288xf32>
    %75 = vector.shape_cast %74 : vector<16x288xf32> to vector<1x16x288xf32>
    %cst_27 = arith.constant dense<0.000000e+00> : vector<1xf32>
    %76 = vector.multi_reduction <add>, %75, %cst_27 [1, 2] : vector<1x16x288xf32> to vector<1xf32>
    %77 = vector.shape_cast %76 : vector<1xf32> to vector<1x1x1xf32>
    %78 = vector.extract %77[0, 0, 0] : f32 from vector<1x1x1xf32>
    %cst_28 = arith.constant 2.44140625E-4 : f32
    %79 = arith.mulf %78, %cst_28 : f32
    %80 = arith.mulf %71, %71 : f32
    %81 = arith.subf %79, %80 : f32
    %82 = vector.broadcast %71 : f32 to vector<16x288xf32>
    %83 = arith.subf %64, %82 : vector<16x288xf32>
    %cst_29 = arith.constant 9.99999974E-6 : f32
    %84 = arith.addf %81, %cst_29 : f32
    %85 = math.rsqrt %84 : f32
    %86 = vector.broadcast %85 : f32 to vector<16x288xf32>
    %87 = arith.mulf %83, %86 : vector<16x288xf32>
    %c0_30 = arith.constant 0 : index
    %c0_31 = arith.constant 0 : index
    %88 = vector.load %arg7[%c0_30, %c0_31] : memref<16x1xf32, #tpu.memory_space<vmem>>, vector<16x1xf32>
    %89 = vector.broadcast %88 : vector<16x1xf32> to vector<16x288xf32>
    %90 = arith.mulf %87, %89 : vector<16x288xf32>
    %c0_32 = arith.constant 0 : index
    %c0_33 = arith.constant 0 : index
    %91 = vector.load %arg8[%c0_32, %c0_33] : memref<16x1xf32, #tpu.memory_space<vmem>>, vector<16x1xf32>
    %92 = vector.broadcast %91 : vector<16x1xf32> to vector<16x288xf32>
    %93 = arith.addf %90, %92 : vector<16x288xf32>
    %c0_34 = arith.constant 0 : index
    %c0_35 = arith.constant 0 : index
    %94 = vector.load %arg9[%c0_34, %c0_35] : memref<16x8xbf16, #tpu.memory_space<vmem>>, vector<16x8xbf16>
    %95 = vector.extract_strided_slice %1 {offsets = [0, 19], sizes = [8, 288], strides = [1, 1]} : vector<8x342xbf16> to vector<8x288xbf16>
    %cst_36 = arith.constant dense<0.000000e+00> : vector<16x288xf32>
    %96 = tpu.matmul %94, %95, %cst_36 {dimension_numbers = #tpu.dot_dimension_numbers<[1], [0], [0], [1], [0, 0, 1, 1], [], []>} : vector<16x8xbf16>, vector<8x288xbf16>, vector<16x288xf32> -> vector<16x288xf32>
    %97 = arith.addf %93, %96 : vector<16x288xf32>
    %cst_37 = arith.constant 0.000000e+00 : f32
    %98 = vector.broadcast %cst_37 : f32 to vector<16x288xf32>
    %99 = arith.maximumf %97, %98 : vector<16x288xf32>
    %c0_38 = arith.constant 0 : index
    %c0_39 = arith.constant 0 : index
    %c0_40 = arith.constant 0 : index
    %100 = vector.load %arg10[%c0_38, %c0_39, %c0_40] : memref<1x16x288xf32, #tpu.memory_space<vmem>>, vector<1x16x288xf32>
    %101 = vector.shape_cast %100 : vector<1x16x288xf32> to vector<16x288xf32>
    %102 = vector.shape_cast %99 : vector<16x288xf32> to vector<1x16x288xf32>
    tpu.vector_store %arg10[%c0_38, %c0_39, %c0_40], %102 {strides = array<i32>} : memref<1x16x288xf32, #tpu.memory_space<vmem>>, vector<1x16x288xf32>,
    return
  }
  func.func @transform_0(%arg0: i32) -> (i32, i32, i32) {
    %c0_i32 = arith.constant 0 : i32
    %c0_i32_0 = arith.constant 0 : i32
    %c0_i32_1 = arith.constant 0 : i32
    return %arg0, %c0_i32, %c0_i32_0 : i32, i32, i32
  }
  func.func @transform_1(%arg0: i32) -> (i32, i32) {
    %c0_i32 = arith.constant 0 : i32
    %c0_i32_0 = arith.constant 0 : i32
    %c0_i32_1 = arith.constant 0 : i32
    return %c0_i32, %c0_i32_0 : i32, i32
  }
  func.func @transform_2(%arg0: i32) -> (i32, i32) {
    %c0_i32 = arith.constant 0 : i32
    %c0_i32_0 = arith.constant 0 : i32
    %c0_i32_1 = arith.constant 0 : i32
    return %c0_i32, %c0_i32_0 : i32, i32
  }
  func.func @transform_3(%arg0: i32) -> (i32, i32) {
    %c0_i32 = arith.constant 0 : i32
    %c0_i32_0 = arith.constant 0 : i32
    %c0_i32_1 = arith.constant 0 : i32
    return %c0_i32, %c0_i32_0 : i32, i32
  }
  func.func @transform_4(%arg0: i32) -> (i32, i32) {
    %c0_i32 = arith.constant 0 : i32
    %c0_i32_0 = arith.constant 0 : i32
    %c0_i32_1 = arith.constant 0 : i32
    return %c0_i32, %c0_i32_0 : i32, i32
  }
  func.func @transform_5(%arg0: i32) -> (i32, i32) {
    %c0_i32 = arith.constant 0 : i32
    %c0_i32_0 = arith.constant 0 : i32
    %c0_i32_1 = arith.constant 0 : i32
    return %c0_i32, %c0_i32_0 : i32, i32
  }
  func.func @transform_6(%arg0: i32) -> (i32, i32) {
    %c0_i32 = arith.constant 0 : i32
    %c0_i32_0 = arith.constant 0 : i32
    %c0_i32_1 = arith.constant 0 : i32
    return %c0_i32, %c0_i32_0 : i32, i32
  }
  func.func @transform_7(%arg0: i32) -> (i32, i32) {
    %c0_i32 = arith.constant 0 : i32
    %c0_i32_0 = arith.constant 0 : i32
    %c0_i32_1 = arith.constant 0 : i32
    return %c0_i32, %c0_i32_0 : i32, i32
  }
  func.func @transform_8(%arg0: i32) -> (i32, i32) {
    %c0_i32 = arith.constant 0 : i32
    %c0_i32_0 = arith.constant 0 : i32
    %c0_i32_1 = arith.constant 0 : i32
    return %c0_i32, %c0_i32_0 : i32, i32
  }
  func.func @transform_9(%arg0: i32) -> (i32, i32, i32) {
    %c0_i32 = arith.constant 0 : i32
    %c0_i32_0 = arith.constant 0 : i32
    %c0_i32_1 = arith.constant 0 : i32
    return %arg0, %c0_i32, %c0_i32_0 : i32, i32, i32
  }
}

</mosaic_0001>

<llo_original>
// kernel: up_block_forward.1
$region0: #{up_block_forward.1}
  #allocation0 [shape = 'u32[]', space=smem, size = 0x4, offset = 0x4, fixed_abs, tag = 'smem constant byte address 0x4 - core index']
  #allocation1 [shape = 'u32[144,128]{1,0:T(1,128)}', space=vmem, size = 0x12000, scoped, tag = 'internal scratch']
  #allocation2 [shape = 'bf16[16,342]{1,0:T(16,128)(2,1)}', space=vmem, size = 0x3000, scoped, tag = 'scratch operand']
  %s0 = inlined_call_operand.vmem [shape: bf16[2,8,342], index: 0, kind: input, shape index: {}]
  %s1 = inlined_call_operand.vmem [shape: f32[1,288], index: 1, kind: input, shape index: {}]
  %s2 = inlined_call_operand.vmem [shape: bf16[16,72], index: 2, kind: input, shape index: {}]
  %s3 = inlined_call_operand.vmem [shape: f32[16,1], index: 3, kind: input, shape index: {}]
  %s4 = inlined_call_operand.vmem [shape: f32[16,1], index: 4, kind: input, shape index: {}]
  %s5 = inlined_call_operand.vmem [shape: bf16[16,144], index: 5, kind: input, shape index: {}]
  %s6 = inlined_call_operand.vmem [shape: f32[16,1], index: 6, kind: input, shape index: {}]
  %s7 = inlined_call_operand.vmem [shape: f32[16,1], index: 7, kind: input, shape index: {}]
  %s8 = inlined_call_operand.vmem [shape: bf16[16,8], index: 8, kind: input, shape index: {}]
  %s9 = inlined_call_operand.vmem [shape: f32[2,16,288], index: 9, kind: output, shape index: {}]
  %s10 = sld [smem:[#allocation0]]
  $region69: #{up_block_forward.1} parent=0
    _
  %s12 = ssub.s32 1, %s10
  %s13 = scalar_select 0, %s12, %s10
  loop: start=0, step=1, limit=4
  $region2: #{up_block_forward.1} parent=0 // loop_pre_header
    _
  $region3: #{up_block_forward.1} parent=0 // loop_header
    %s15 = sphi 0, %s19
    %p16 = scmp.ge.s32.totalorder %s15, 4
    %s25 = sphi 0, %s27
    %s28 = sphi 0, %s25
    %s29 = sphi 0, %s28
    %s45 = sphi 0, %s29
    %s49 = sphi 0, %s49
    %s51 = sphi 0, %s49
    %s52 = sphi 0, %s51
    %s66 = sphi 0, %s52
    %s70 = sphi 0, %s70
    %s72 = sphi 0, %s70
    %s73 = sphi 0, %s72
    %s87 = sphi 0, %s73
    %s91 = sphi 0, %s91
    %s93 = sphi 0, %s91
    %s94 = sphi 0, %s93
    %s108 = sphi 0, %s94
    %s112 = sphi 0, %s112
    %s114 = sphi 0, %s112
    %s115 = sphi 0, %s114
    %s129 = sphi 0, %s115
    %s133 = sphi 0, %s133
    %s135 = sphi 0, %s133
    %s136 = sphi 0, %s135
    %s150 = sphi 0, %s136
    %s154 = sphi 0, %s154
    %s156 = sphi 0, %s154
    %s157 = sphi 0, %s156
    %s171 = sphi 0, %s157
    %s175 = sphi 0, %s175
    %s177 = sphi 0, %s175
    %s178 = sphi 0, %s177
    %s192 = sphi 0, %s178
    %s196 = sphi 0, %s196
    %s198 = sphi 0, %s196
    %s199 = sphi 0, %s198
    %s213 = sphi 0, %s199
    %s219 = sphi 0, %s221
    %s222 = sphi 0, %s219
    %s223 = sphi 0, %s222
    %s239 = sphi 0, %s223
  $region4: #{up_block_forward.1} parent=0 // loop_header_branch
    %18 = sbr.rel (%p16) target = $region8
  $region5: #{up_block_forward.1} parent=0 // loop_body
    %s20 = ssub.s32 %s15, 1
    %s21 = ssub.s32 %s15, 2
    %s22 = sadd.s32 %s15, 1
    %s23 = ssub.s32 %s15, %s22
    %p24 = scmp.eq.s32.totalorder %s23, 0
    %s26 = sadd.s32 %s25, 1
    %s27 = scalar_select %p24, %s25, %s26
    %p30 = pneg %p24
    %p31 = scmp.eq.s32.totalorder %s15, 1
    %p32 = por %p30, %p31
    %p33 = scmp.ne.s32.totalorder %s25, %s28
    %p34 = scmp.eq.s32.totalorder %s15, 0
    %p35 = por %p33, %p34
    %p36 = scmp.ne.s32.totalorder %s25, %s28
    %p37 = scmp.eq.s32.totalorder %s20, 1
    %p38 = por %p36, %p37
    %p39 = scmp.ne.s32.totalorder %s28, %s29
    %p40 = scmp.eq.s32.totalorder %s20, 0
    %p41 = por %p39, %p40
    %p42 = scmp.ne.s32.totalorder %s28, %s29
    %p43 = scmp.eq.s32.totalorder %s21, 1
    %p44 = por %p42, %p43
    %p46 = scmp.ne.s32.totalorder %s29, %s45
    %p47 = scmp.eq.s32.totalorder %s21, 0
    %p48 = por %p46, %p47
    %s50 = sadd.s32 %s49, 1
    %p53 = scmp.eq.s32.totalorder %s15, 1
    %p54 = scmp.ne.s32.totalorder %s49, %s51
    %p55 = scmp.eq.s32.totalorder %s15, 0
    %p56 = por %p54, %p55
    %p57 = scmp.ne.s32.totalorder %s49, %s51
    %p58 = scmp.eq.s32.totalorder %s20, 1
    %p59 = por %p57, %p58
    %p60 = scmp.ne.s32.totalorder %s51, %s52
    %p61 = scmp.eq.s32.totalorder %s20, 0
    %p62 = por %p60, %p61
    %p63 = scmp.ne.s32.totalorder %s51, %s52
    %p64 = scmp.eq.s32.totalorder %s21, 1
    %p65 = por %p63, %p64
    %p67 = scmp.ne.s32.totalorder %s52, %s66
    %p68 = scmp.eq.s32.totalorder %s21, 0
    %p69 = por %p67, %p68
    %s71 = sadd.s32 %s70, 1
    %p74 = scmp.eq.s32.totalorder %s15, 1
    %p75 = scmp.ne.s32.totalorder %s70, %s72
    %p76 = scmp.eq.s32.totalorder %s15, 0
    %p77 = por %p75, %p76
    %p78 = scmp.ne.s32.totalorder %s70, %s72
    %p79 = scmp.eq.s32.totalorder %s20, 1
    %p80 = por %p78, %p79
    %p81 = scmp.ne.s32.totalorder %s72, %s73
    %p82 = scmp.eq.s32.totalorder %s20, 0
    %p83 = por %p81, %p82
    %p84 = scmp.ne.s32.totalorder %s72, %s73
    %p85 = scmp.eq.s32.totalorder %s21, 1
    %p86 = por %p84, %p85
    %p88 = scmp.ne.s32.totalorder %s73, %s87
    %p89 = scmp.eq.s32.totalorder %s21, 0
    %p90 = por %p88, %p89
    %s92 = sadd.s32 %s91, 1
    %p95 = scmp.eq.s32.totalorder %s15, 1
    %p96 = scmp.ne.s32.totalorder %s91, %s93
    %p97 = scmp.eq.s32.totalorder %s15, 0
    %p98 = por %p96, %p97
    %p99 = scmp.ne.s32.totalorder %s91, %s93
    %p100 = scmp.eq.s32.totalorder %s20, 1
    %p101 = por %p99, %p100
    %p102 = scmp.ne.s32.totalorder %s93, %s94
    %p103 = scmp.eq.s32.totalorder %s20, 0
    %p104 = por %p102, %p103
    %p105 = scmp.ne.s32.totalorder %s93, %s94
    %p106 = scmp.eq.s32.totalorder %s21, 1
    %p107 = por %p105, %p106
    %p109 = scmp.ne.s32.totalorder %s94, %s108
    %p110 = scmp.eq.s32.totalorder %s21, 0
    %p111 = por %p109, %p110
    %s113 = sadd.s32 %s112, 1
    %p116 = scmp.eq.s32.totalorder %s15, 1
    %p117 = scmp.ne.s32.totalorder %s112, %s114
    %p118 = scmp.eq.s32.totalorder %s15, 0
    %p119 = por %p117, %p118
    %p120 = scmp.ne.s32.totalorder %s112, %s114
    %p121 = scmp.eq.s32.totalorder %s20, 1
    %p122 = por %p120, %p121
    %p123 = scmp.ne.s32.totalorder %s114, %s115
    %p124 = scmp.eq.s32.totalorder %s20, 0
    %p125 = por %p123, %p124
    %p126 = scmp.ne.s32.totalorder %s114, %s115
    %p127 = scmp.eq.s32.totalorder %s21, 1
    %p128 = por %p126, %p127
    %p130 = scmp.ne.s32.totalorder %s115, %s129
    %p131 = scmp.eq.s32.totalorder %s21, 0
    %p132 = por %p130, %p131
    %s134 = sadd.s32 %s133, 1
    %p137 = scmp.eq.s32.totalorder %s15, 1
    %p138 = scmp.ne.s32.totalorder %s133, %s135
    %p139 = scmp.eq.s32.totalorder %s15, 0
    %p140 = por %p138, %p139
    %p141 = scmp.ne.s32.totalorder %s133, %s135
    %p142 = scmp.eq.s32.totalorder %s20, 1
    %p143 = por %p141, %p142
    %p144 = scmp.ne.s32.totalorder %s135, %s136
    %p145 = scmp.eq.s32.totalorder %s20, 0
    %p146 = por %p144, %p145
    %p147 = scmp.ne.s32.totalorder %s135, %s136
    %p148 = scmp.eq.s32.totalorder %s21, 1
    %p149 = por %p147, %p148
    %p151 = scmp.ne.s32.totalorder %s136, %s150
    %p152 = scmp.eq.s32.totalorder %s21, 0
    %p153 = por %p151, %p152
    %s155 = sadd.s32 %s154, 1
    %p158 = scmp.eq.s32.totalorder %s15, 1
    %p159 = scmp.ne.s32.totalorder %s154, %s156
    %p160 = scmp.eq.s32.totalorder %s15, 0
    %p161 = por %p159, %p160
    %p162 = scmp.ne.s32.totalorder %s154, %s156
    %p163 = scmp.eq.s32.totalorder %s20, 1
    %p164 = por %p162, %p163
    %p165 = scmp.ne.s32.totalorder %s156, %s157
    %p166 = scmp.eq.s32.totalorder %s20, 0
    %p167 = por %p165, %p166
    %p168 = scmp.ne.s32.totalorder %s156, %s157
    %p169 = scmp.eq.s32.totalorder %s21, 1
    %p170 = por %p168, %p169
    %p172 = scmp.ne.s32.totalorder %s157, %s171
    %p173 = scmp.eq.s32.totalorder %s21, 0
    %p174 = por %p172, %p173
    %s176 = sadd.s32 %s175, 1
    %p179 = scmp.eq.s32.totalorder %s15, 1
    %p180 = scmp.ne.s32.totalorder %s175, %s177
    %p181 = scmp.eq.s32.totalorder %s15, 0
    %p182 = por %p180, %p181
    %p183 = scmp.ne.s32.totalorder %s175, %s177
    %p184 = scmp.eq.s32.totalorder %s20, 1
    %p185 = por %p183, %p184
    %p186 = scmp.ne.s32.totalorder %s177, %s178
    %p187 = scmp.eq.s32.totalorder %s20, 0
    %p188 = por %p186, %p187
    %p189 = scmp.ne.s32.totalorder %s177, %s178
    %p190 = scmp.eq.s32.totalorder %s21, 1
    %p191 = por %p189, %p190
    %p193 = scmp.ne.s32.totalorder %s178, %s192
    %p194 = scmp.eq.s32.totalorder %s21, 0
    %p195 = por %p193, %p194
    %s197 = sadd.s32 %s196, 1
    %p200 = scmp.eq.s32.totalorder %s15, 1
    %p201 = scmp.ne.s32.totalorder %s196, %s198
    %p202 = scmp.eq.s32.totalorder %s15, 0
    %p203 = por %p201, %p202
    %p204 = scmp.ne.s32.totalorder %s196, %s198
    %p205 = scmp.eq.s32.totalorder %s20, 1
    %p206 = por %p204, %p205
    %p207 = scmp.ne.s32.totalorder %s198, %s199
    %p208 = scmp.eq.s32.totalorder %s20, 0
    %p209 = por %p207, %p208
    %p210 = scmp.ne.s32.totalorder %s198, %s199
    %p211 = scmp.eq.s32.totalorder %s21, 1
    %p212 = por %p210, %p211
    %p214 = scmp.ne.s32.totalorder %s199, %s213
    %p215 = scmp.eq.s32.totalorder %s21, 0
    %p216 = por %p214, %p215
    %s217 = ssub.s32 %s15, %s22
    %p218 = scmp.eq.s32.totalorder %s217, 0
    %s220 = sadd.s32 %s219, 1
    %s221 = scalar_select %p218, %s219, %s220
    %p224 = pneg %p218
    %p225 = scmp.eq.s32.totalorder %s15, 1
    %p226 = por %p224, %p225
    %p227 = scmp.ne.s32.totalorder %s219, %s222
    %p228 = scmp.eq.s32.totalorder %s15, 0
    %p229 = por %p227, %p228
    %p230 = scmp.ne.s32.totalorder %s219, %s222
    %p231 = scmp.eq.s32.totalorder %s20, 1
    %p232 = por %p230, %p231
    %p233 = scmp.ne.s32.totalorder %s222, %s223
    %p234 = scmp.eq.s32.totalorder %s20, 0
    %p235 = por %p233, %p234
    %p236 = scmp.ne.s32.totalorder %s222, %s223
    %p237 = scmp.eq.s32.totalorder %s21, 1
    %p238 = por %p236, %p237
    %p240 = scmp.ne.s32.totalorder %s223, %s239
    %p241 = scmp.eq.s32.totalorder %s21, 0
    %p242 = por %p240, %p241
    %p243 = scmp.le.s32.totalorder 1, %s15
    %p244 = scmp.lt.s32.totalorder %s15, 3
    %p245 = pnand %p243, %p244
    %p246 = pneg %p245
    // Predicated region
    $region9: #{up_block_forward.1} parent=5 // pred_check
      _
    $region10: #{up_block_forward.1} parent=5 // pred_check_branch
      %248 = sbr.rel (%p245) target = $region12
    $region11: #{up_block_forward.1} parent=5 // pred_region
      %s249 = ssub.s32 %s15, 1
      // Predicated region
      $region13: #{up_block_forward.1} parent=11 // pred_check
        %p250 = pneg %p62
      $region14: #{up_block_forward.1} parent=11 // pred_check_branch
        %252 = sbr.rel (%p250) target = $region16
      $region15: #{up_block_forward.1} parent=11 // pred_region
        _
      $region16: #{up_block_forward.1} parent=11 // pred_fallthru
        _
      // Predicated region
      $region17: #{up_block_forward.1} parent=11 // pred_check
        %p253 = pneg %p83
      $region18: #{up_block_forward.1} parent=11 // pred_check_branch
        %255 = sbr.rel (%p253) target = $region20
      $region19: #{up_block_forward.1} parent=11 // pred_region
        _
      $region20: #{up_block_forward.1} parent=11 // pred_fallthru
        _
      // Predicated region
      $region21: #{up_block_forward.1} parent=11 // pred_check
        %p256 = pneg %p104
      $region22: #{up_block_forward.1} parent=11 // pred_check_branch
        %258 = sbr.rel (%p256) target = $region24
      $region23: #{up_block_forward.1} parent=11 // pred_region
        _
      $region24: #{up_block_forward.1} parent=11 // pred_fallthru
        _
      // Predicated region
      $region25: #{up_block_forward.1} parent=11 // pred_check
        %p259 = pneg %p125
      $region26: #{up_block_forward.1} parent=11 // pred_check_branch
        %261 = sbr.rel (%p259) target = $region28
      $region27: #{up_block_forward.1} parent=11 // pred_region
        _
      $region28: #{up_block_forward.1} parent=11 // pred_fallthru
        _
      // Predicated region
      $region29: #{up_block_forward.1} parent=11 // pred_check
        %p262 = pneg %p146
      $region30: #{up_block_forward.1} parent=11 // pred_check_branch
        %264 = sbr.rel (%p262) target = $region32
      $region31: #{up_block_forward.1} parent=11 // pred_region
        _
      $region32: #{up_block_forward.1} parent=11 // pred_fallthru
        _
      // Predicated region
      $region33: #{up_block_forward.1} parent=11 // pred_check
        %p265 = pneg %p167
      $region34: #{up_block_forward.1} parent=11 // pred_check_branch
        %267 = sbr.rel (%p265) target = $region36
      $region35: #{up_block_forward.1} parent=11 // pred_region
        _
      $region36: #{up_block_forward.1} parent=11 // pred_fallthru
        _
      // Predicated region
      $region37: #{up_block_forward.1} parent=11 // pred_check
        %p268 = pneg %p188
      $region38: #{up_block_forward.1} parent=11 // pred_check_branch
        %270 = sbr.rel (%p268) target = $region40
      $region39: #{up_block_forward.1} parent=11 // pred_region
        _
      $region40: #{up_block_forward.1} parent=11 // pred_fallthru
        _
      // Predicated region
      $region41: #{up_block_forward.1} parent=11 // pred_check
        %p271 = pneg %p209
      $region42: #{up_block_forward.1} parent=11 // pred_check_branch
        %273 = sbr.rel (%p271) target = $region44
      $region43: #{up_block_forward.1} parent=11 // pred_region
        _
      $region44: #{up_block_forward.1} parent=11 // pred_fallthru
        _
    $region12: #{up_block_forward.1} parent=5 // pred_fallthru
      _
    %p274 = scmp.lt.s32.totalorder %s15, 2
    // Predicated region
    $region45: #{up_block_forward.1} parent=5 // pred_check
      %p275 = pneg %p274
    $region46: #{up_block_forward.1} parent=5 // pred_check_branch
      %277 = sbr.rel (%p275) target = $region48
    $region47: #{up_block_forward.1} parent=5 // pred_region
      // Predicated region
      $region49: #{up_block_forward.1} parent=47 // pred_check
        %p278 = pneg %p35
      $region50: #{up_block_forward.1} parent=47 // pred_check_branch
        %280 = sbr.rel (%p278) target = $region52
      $region51: #{up_block_forward.1} parent=47 // pred_region
        %p281 = scmp.lt.s32.totalorder %s15, 1
        %s282 = scalar_select %p281, %s15, 1
        %s283 = smul.addr %s282, 3
        %s284 = smul.addr %s283, 4
        %s285 = scalar_lea.vmem %s0, %s284
      $region52: #{up_block_forward.1} parent=47 // pred_fallthru
        _
    $region48: #{up_block_forward.1} parent=5 // pred_fallthru
      _
    %p286 = scmp.le.s32.totalorder 1, %s15
    %p287 = scmp.lt.s32.totalorder %s15, 3
    %p288 = pnand %p286, %p287
    %p289 = pneg %p288
    // Predicated region
    $region53: #{up_block_forward.1} parent=5 // pred_check
      _
    $region54: #{up_block_forward.1} parent=5 // pred_check_branch
      %291 = sbr.rel (%p288) target = $region56
    $region55: #{up_block_forward.1} parent=5 // pred_region
      %s292 = ssub.s32 %s15, 1
      %p293 = scmp.lt.s32.totalorder %s20, 1
      %s294 = scalar_select %p293, %s20, 1
      %s295 = smul.addr %s294, 3
      %s296 = smul.addr %s295, 4
      %s297 = scalar_lea.vmem %s0, %s296
      %p298 = pneg %p41
      %p299 = pneg %p38
      %p300 = pneg %p62
      %p301 = pneg %p59
      %p302 = pneg %p83
      %p303 = pneg %p80
      %p304 = pneg %p104
      %p305 = pneg %p101
      %p306 = pneg %p125
      %p307 = pneg %p122
      %p308 = pneg %p146
      %p309 = pneg %p143
      %p310 = pneg %p167
      %p311 = pneg %p164
      %p312 = pneg %p188
      %p313 = pneg %p185
      %p314 = pneg %p209
      %p315 = pneg %p206
      %p316 = pneg %p235
      %p317 = pneg %p232
      %p318 = scmp.lt.s32.totalorder %s20, 1
      %s319 = scalar_select %p318, %s20, 1
      %s320 = smul.addr %s319, 6
      %s321 = smul.addr %s320, 8
      %s322 = scalar_lea.vmem %s9, %s321
      %p323 = scmp.lt.s32.totalorder %s20, 1
      %s324 = scalar_select %p323, %s20, 1
      %s325 = smul.addr %s324, 3
      %s326 = smul.addr %s325, 4
      %s327 = scalar_lea.vmem %s0, %s326
      %p328 = scmp.lt.s32.totalorder %s20, 1
      %s329 = scalar_select %p328, %s20, 1
      %s330 = smul.addr %s329, 6
      %s331 = smul.addr %s330, 8
      %s332 = scalar_lea.vmem %s9, %s331
      %v334 = vld [vmem:[%s327] sm:$0xff]
      %v335 = vld [vmem:[%s327 + $0x8] sm:$0xf]
      %v336 = vld [vmem:[%s1] sm:$0x7]
      %v339 = vunpack.c.l.b16 %v334
      %v340 = vunpack.c.h.b16 %v334
      %v341 = vunpack.c.l.b16 %v335
      %v342 = vpack.c.b16 %v339, %v339
      %v343 = vpack.c.b16 %v340, %v340
      %v344 = vpack.c.b16 %v341, %v341
      %345 = vrot.lane.b32.xlu0 %v342, 127
      %v346 = vpop.permute.xlu0 %345
      %347 = vrot.lane.b32.xlu0 %v343, 127
      %v348 = vpop.permute.xlu0 %347
      %349 = vrot.lane.b32.xlu0 %v344, 127
      %v350 = vpop.permute.xlu0 %349
      %vm351 = vcmask 1039360
      %v352 = vsel %vm351, %v346, %v348
      %v353 = vsel %vm351, %v348, %v350
      %354 = vrot.lane.b32.xlu0 %v342, 126
      %v355 = vpop.permute.xlu0 %354
      %356 = vrot.lane.b32.xlu0 %v343, 126
      %v357 = vpop.permute.xlu0 %356
      %358 = vrot.lane.b32.xlu0 %v344, 126
      %v359 = vpop.permute.xlu0 %358
      %vm360 = vcmask 1031168
      %v361 = vsel %vm360, %v355, %v357
      %v362 = vsel %vm360, %v357, %v359
      %363 = vrot.lane.b32.xlu0 %v342, 110
      %v364 = vpop.permute.xlu0 %363
      %365 = vrot.lane.b32.xlu0 %v343, 110
      %v366 = vpop.permute.xlu0 %365
      %367 = vrot.lane.b32.xlu0 %v344, 110
      %v368 = vpop.permute.xlu0 %367
      %vm369 = vcmask 900096
      %v370 = vsel %vm369, %v364, %v366
      %v371 = vsel %vm369, %v366, %v368
      %372 = vrot.lane.b32.xlu0 %v342, 109
      %v373 = vpop.permute.xlu0 %372
      %374 = vrot.lane.b32.xlu0 %v343, 109
      %v375 = vpop.permute.xlu0 %374
      %376 = vrot.lane.b32.xlu0 %v344, 109
      %v377 = vpop.permute.xlu0 %376
      %vm378 = vcmask 891904
      %v379 = vsel %vm378, %v373, %v375
      %v380 = vsel %vm378, %v375, %v377
      %381 = vrot.lane.b32.xlu0 %v342, 108
      %v382 = vpop.permute.xlu0 %381
      %383 = vrot.lane.b32.xlu0 %v343, 108
      %v384 = vpop.permute.xlu0 %383
      %385 = vrot.lane.b32.xlu0 %v344, 108
      %v386 = vpop.permute.xlu0 %385
      %vm387 = vcmask 883712
      %v388 = vsel %vm387, %v382, %v384
      %v389 = vsel %vm387, %v384, %v386
      %390 = vrot.lane.b32.xlu0 %v342, 92
      %v391 = vpop.permute.xlu0 %390
      %392 = vrot.lane.b32.xlu0 %v343, 92
      %v393 = vpop.permute.xlu0 %392
      %394 = vrot.lane.b32.xlu0 %v344, 92
      %v395 = vpop.permute.xlu0 %394
      %vm396 = vcmask 752640
      %v397 = vsel %vm396, %v391, %v393
      %v398 = vsel %vm396, %v393, %v395
      %399 = vrot.lane.b32.xlu0 %v342, 91
      %v400 = vpop.permute.xlu0 %399
      %401 = vrot.lane.b32.xlu0 %v343, 91
      %v402 = vpop.permute.xlu0 %401
      %403 = vrot.lane.b32.xlu0 %v344, 91
      %v404 = vpop.permute.xlu0 %403
      %vm405 = vcmask 744448
      %v406 = vsel %vm405, %v400, %v402
      %v407 = vsel %vm405, %v402, %v404
      %408 = vrot.lane.b32.xlu0 %v342, 90
      %v409 = vpop.permute.xlu0 %408
      %410 = vrot.lane.b32.xlu0 %v343, 90
      %v411 = vpop.permute.xlu0 %410
      %412 = vrot.lane.b32.xlu0 %v344, 90
      %v413 = vpop.permute.xlu0 %412
      %vm414 = vcmask 736256
      %v415 = vsel %vm414, %v409, %v411
      %v416 = vsel %vm414, %v411, %v413
      %vm417 = vcmask 1043456
      %v420 = vsel %vm417, %v342, %v352
      %v424 = vsel %vm417, %v343, %v353
      %v428 = vsel %vm417, %v344, %v350
      %v432 = vsel %vm417, %v361, %v370
      %v436 = vsel %vm417, %v362, %v371
      %v440 = vsel %vm417, %v359, %v368
      %v444 = vsel %vm417, %v379, %v388
      %v448 = vsel %vm417, %v380, %v389
      %v452 = vsel %vm417, %v377, %v386
      %v456 = vsel %vm417, %v397, %v406
      %v460 = vsel %vm417, %v398, %v407
      %v464 = vsel %vm417, %v395, %v404
      %v466 = vld [vmem:[%s2] sm:$0xf]
      %v467 = vld [vmem:[%s2 + $0x4] sm:$0xf]
      %v470 = vunpack.c.l.b16 %v466
      %v471 = vunpack.c.l.b16 %v467
      %v472 = vpack.c.b16 %v471, %v470
      %vm473 = vcmask 588800
      %v475 = vsel %vm473, %v472, 0
      %v478 = vsel %vm417, %v415, 0
      %v481 = vsel %vm417, %v416, 0
      %v484 = vsel %vm417, %v413, 0
      %486 = vmatprep.subr.bf16.mxu0 %v424
      %487 = vmatpush1.bf16.msra.mxu0 %v420
      %488 = vmatprep.subr.bf16.mxu0 %v436
      %489 = vmatpush1.bf16.msra.mxu0 %v432
      %490 = vmatprep.subr.bf16.mxu0 %v448
      %491 = vmatpush1.bf16.msra.mxu0 %v444
      %492 = vmatprep.subr.bf16.mxu0 %v460
      %493 = vmatpush1.bf16.msra.mxu0 %v456
      %494 = vmatprep.subr.bf16.mxu0 %v481
      %495 = vmatpush1.bf16.msra.mxu0 %v478
      %496 = vmatprep.subr.bf16.mxu0 0
      %497 = vmatpush1.bf16.msra.mxu0 0
      %498 = vmatprep.subr.bf16.mxu0 0
      %499 = vmatpush1.bf16.msra.mxu0 0
      %500 = vmatprep.subr.bf16.mxu0 0
      %501 = vmatpush1.bf16.msra.mxu0 0
      %502 = vmatprep.subr.bf16.mxu0 0
      %503 = vmatpush1.bf16.msra.mxu0 0
      %504 = vmatprep.subr.bf16.mxu0 0
      %505 = vmatpush1.bf16.msra.mxu0 0
      %506 = vmatprep.subr.bf16.mxu0 0
      %507 = vmatpush1.bf16.msra.mxu0 0
      %508 = vmatprep.subr.bf16.mxu0 0
      %509 = vmatpush1.bf16.msra.mxu0 0
      %510 = vmatprep.subr.bf16.mxu0 0
      %511 = vmatpush1.bf16.msra.mxu0 0
      %512 = vmatprep.subr.bf16.mxu0 0
      %513 = vmatpush1.bf16.msra.mxu0 0
      %514 = vmatprep.subr.bf16.mxu0 0
      %515 = vmatpush1.bf16.msra.mxu0 0
      %516 = vmatprep.subr.bf16.mxu0 0
      %517 = vmatpush1.bf16.msra.mxu0 0
      %518 = vmatprep.mubr.bf16.mxu0 0
      %519 = vmatmul.mubr.bf16.gmra.mrb[0].mxu0 %v475
      %v520 = vpop.f32.mrb[0].mxu0
      %v521 = vadd.f32 0.0, %v520
      %v522 = vpop.f32.mrb[0].mxu0
      %v523 = vadd.f32 0.0, %v522
      %v524 = vpop.f32.mrb[0].mxu0
      %v525 = vadd.f32 0.0, %v524
      %v526 = vpop.f32.mrb[0].mxu0
      %v527 = vadd.f32 0.0, %v526
      %528 = vdwg.mxu0
      %529 = vmatprep.subr.bf16.mxu0 0
      %530 = vmatpush1.bf16.msra.mxu0 %v428
      %531 = vmatprep.subr.bf16.mxu0 0
      %532 = vmatpush1.bf16.msra.mxu0 %v440
      %533 = vmatprep.subr.bf16.mxu0 0
      %534 = vmatpush1.bf16.msra.mxu0 %v452
      %535 = vmatprep.subr.bf16.mxu0 0
      %536 = vmatpush1.bf16.msra.mxu0 %v464
      %537 = vmatprep.subr.bf16.mxu0 0
      %538 = vmatpush1.bf16.msra.mxu0 %v484
      %539 = vmatprep.subr.bf16.mxu0 0
      %540 = vmatpush1.bf16.msra.mxu0 0
      %541 = vmatprep.subr.bf16.mxu0 0
      %542 = vmatpush1.bf16.msra.mxu0 0
      %543 = vmatprep.subr.bf16.mxu0 0
      %544 = vmatpush1.bf16.msra.mxu0 0
      %545 = vmatprep.subr.bf16.mxu0 0
      %546 = vmatpush1.bf16.msra.mxu0 0
      %547 = vmatprep.subr.bf16.mxu0 0
      %548 = vmatpush1.bf16.msra.mxu0 0
      %549 = vmatprep.subr.bf16.mxu0 0
      %550 = vmatpush1.bf16.msra.mxu0 0
      %551 = vmatprep.subr.bf16.mxu0 0
      %552 = vmatpush1.bf16.msra.mxu0 0
      %553 = vmatprep.subr.bf16.mxu0 0
      %554 = vmatpush1.bf16.msra.mxu0 0
      %555 = vmatprep.subr.bf16.mxu0 0
      %556 = vmatpush1.bf16.msra.mxu0 0
      %557 = vmatprep.subr.bf16.mxu0 0
      %558 = vmatpush1.bf16.msra.mxu0 0
      %559 = vmatprep.subr.bf16.mxu0 0
      %560 = vmatpush1.bf16.msra.mxu0 0
      %561 = vmatprep.mubr.bf16.mxu0 0
      %562 = vmatmul.mubr.bf16.gmra.mrb[0].mxu0 %v475
      %v563 = vpop.f32.mrb[0].mxu0
      %v564 = vadd.f32 0.0, %v563
      %v565 = vpop.f32.mrb[0].mxu0
      %v566 = vpop.f32.mrb[0].mxu0
      %v567 = vadd.f32 0.0, %v566
      %v568 = vpop.f32.mrb[0].mxu0
      %569 = vdwg.mxu0
      %v571 = vlaneseq
      %v572 = vshrl.u32 %v571, 7
      %v573 = vsub.s32 0, %v572
      %v574 = vrot.slane %v336, %v573
      %v575 = vlaneseq
      %v576 = vshrl.u32 %v575, 7
      %v577 = vsub.s32 1, %v576
      %v578 = vrot.slane %v336, %v577
      %v579 = vlaneseq
      %v580 = vshrl.u32 %v579, 7
      %v581 = vsub.s32 2, %v580
      %v582 = vrot.slane %v336, %v581
      %v586 = vmul.f32 %v521, %v574
      %v587 = vmul.f32 %v523, %v578
      %v588 = vmul.f32 %v564, %v582
      %v589 = vmul.f32 %v525, %v574
      %v590 = vmul.f32 %v527, %v578
      %v591 = vmul.f32 %v567, %v582
      %v592 = vadd.f32 %v586, %v587
      %vm593 = vcmask 261120
      %v594 = vsel %vm593, %v588, 0.0
      %v595 = vadd.f32 %v592, %v594
      %v596 = vadd.f32 %v595, %v589
      %v597 = vadd.f32 %v596, %v590
      %v598 = vsel %vm593, %v591, 0.0
      %v599 = vadd.f32 %v597, %v598
      %600 = vadd.xlane.f32.xlu0 %v599
      %v601 = vpop.xlane.xlu0 %600
      %v602 = vrot.slane %v601, 4
      %v603 = vadd.f32 %v601, %v602
      %v604 = vrot.slane %v603, 2
      %v605 = vadd.f32 %v603, %v604
      %v606 = vrot.slane %v605, 1
      %v607 = vadd.f32 %v605, %v606
      %s608 = vtos %v607
      %s609 = smul.f32 %s608, 0.00024414063
      %v610 = vmul.f32 %v521, %v521
      %v611 = vmul.f32 %v523, %v523
      %v612 = vmul.f32 %v564, %v564
      %v613 = vmul.f32 %v525, %v525
      %v614 = vmul.f32 %v527, %v527
      %v615 = vmul.f32 %v567, %v567
      %v616 = vmul.f32 %v610, %v574
      %v617 = vmul.f32 %v611, %v578
      %v618 = vmul.f32 %v612, %v582
      %v619 = vmul.f32 %v613, %v574
      %v620 = vmul.f32 %v614, %v578
      %v621 = vmul.f32 %v615, %v582
      %v622 = vadd.f32 %v616, %v617
      %v623 = vsel %vm593, %v618, 0.0
      %v624 = vadd.f32 %v622, %v623
      %v625 = vadd.f32 %v624, %v619
      %v626 = vadd.f32 %v625, %v620
      %v627 = vsel %vm593, %v621, 0.0
      %v628 = vadd.f32 %v626, %v627
      %629 = vadd.xlane.f32.xlu0 %v628
      %v630 = vpop.xlane.xlu0 %629
      %v631 = vrot.slane %v630, 4
      %v632 = vadd.f32 %v630, %v631
      %v633 = vrot.slane %v632, 2
      %v634 = vadd.f32 %v632, %v633
      %v635 = vrot.slane %v634, 1
      %v636 = vadd.f32 %v634, %v635
      %s637 = vtos %v636
      %s638 = smul.f32 %s637, 0.00024414063
      %s639 = smul.f32 %s609, %s609
      %s640 = ssub.f32 %s638, %s639
      %v641 = vstv %s609
      %v642 = vsub.f32 %v521, %v641
      %v643 = vsub.f32 %v523, %v641
      %v644 = vsub.f32 %v564, %v641
      %v645 = vsub.f32 %v525, %v641
      %v646 = vsub.f32 %v527, %v641
      %v647 = vsub.f32 %v567, %v641
      %s648 = sadd.f32 %s640, 1e-05
      %v649 = vstv %s648
      %v650 = vrsqrt.pop %v649
      %s651 = vtos %v650
      %v652 = vstv %s651
      %v653 = vmul.f32 %v642, %v652
      %v654 = vmul.f32 %v643, %v652
      %v655 = vmul.f32 %v644, %v652
      %v656 = vmul.f32 %v645, %v652
      %v657 = vmul.f32 %v646, %v652
      %v658 = vmul.f32 %v647, %v652
      %v659 = vld [vmem:[%s3] sm:$0xff]
      %v660 = vld [vmem:[%s3 + $0x8] sm:$0xff]
      %662 = vset.pattern.permute.xlu0 0
      %663 = vperm.xlu0 %662, %v659
      %v664 = vpop.permute.xlu0 %663
      %667 = vset.pattern.permute.xlu0 0
      %668 = vperm.xlu0 %667, %v660
      %v669 = vpop.permute.xlu0 %668
      %v671 = vmul.f32 %v653, %v664
      %v672 = vmul.f32 %v654, %v664
      %v673 = vmul.f32 %v655, %v664
      %v674 = vmul.f32 %v656, %v669
      %v675 = vmul.f32 %v657, %v669
      %v676 = vmul.f32 %v658, %v669
      %v677 = vld [vmem:[%s4] sm:$0xff]
      %v678 = vld [vmem:[%s4 + $0x8] sm:$0xff]
      %680 = vset.pattern.permute.xlu0 0
      %681 = vperm.xlu0 %680, %v677
      %v682 = vpop.permute.xlu0 %681
      %685 = vset.pattern.permute.xlu0 0
      %686 = vperm.xlu0 %685, %v678
      %v687 = vpop.permute.xlu0 %686
      %v689 = vadd.f32 %v671, %v682
      %v690 = vadd.f32 %v672, %v682
      %v691 = vadd.f32 %v673, %v682
      %v692 = vadd.f32 %v674, %v687
      %v693 = vadd.f32 %v675, %v687
      %v694 = vadd.f32 %v676, %v687
      %v695 = vmax.f32 %v689, 0.0
      %v696 = vmax.f32 %v690, 0.0
      %v697 = vmax.f32 %v691, 0.0
      %v698 = vmax.f32 %v692, 0.0
      %v699 = vmax.f32 %v693, 0.0
      %v700 = vmax.f32 %v694, 0.0
      %v701 = vmul.f32 %v695, %v574
      %v702 = vmul.f32 %v696, %v578
      %v703 = vmul.f32 %v697, %v582
      %v704 = vmul.f32 %v698, %v574
      %v705 = vmul.f32 %v699, %v578
      %v706 = vmul.f32 %v700, %v582
      %707 = vst [vmem:[#allocation2] sm:$0xff] 0
      %708 = vst [vmem:[#allocation2 + $0x8] sm:$0xff] 0
      %vm709 = vcmask 703488
      %710 = vst.msk [vmem:[#allocation2 + $0x10] sm:$0xff] %vm709, 0
      %v711 = vpack.c.bf16 %v704, %v701
      %v712 = vpack.c.bf16 %v705, %v702
      %v713 = vpack.c.bf16 %v706, %v703
      %717 = vrot.lane.b32.xlu0 %v711, 19
      %v718 = vpop.permute.xlu0 %717
      %719 = vrot.lane.b32.xlu0 %v712, 19
      %v720 = vpop.permute.xlu0 %719
      %721 = vrot.lane.b32.xlu0 %v713, 19
      %v722 = vpop.permute.xlu0 %721
      %vm723 = vcmask 154624
      %v724 = vsel %vm723, %v718, %v720
      %v725 = vsel %vm723, %v720, %v722
      %vm729 = vcmask 1047704
      %730 = vst.msk [vmem:[#allocation2] sm:$0xff] %vm729, %v718
      %731 = vst [vmem:[#allocation2 + $0x8] sm:$0xff] %v724
      %vm732 = vcmask 416768
      %733 = vst.msk [vmem:[#allocation2 + $0x10] sm:$0xff] %vm732, %v725
      %v734 = vld [vmem:[#allocation2] sm:$0xff]
      %v735 = vld [vmem:[#allocation2 + $0x8] sm:$0xff]
      %v736 = vld [vmem:[#allocation2 + $0x10] sm:$0xff]
      %740 = vrot.lane.b32.xlu0 %v734, 127
      %v741 = vpop.permute.xlu0 %740
      %742 = vrot.lane.b32.xlu0 %v735, 127
      %v743 = vpop.permute.xlu0 %742
      %744 = vrot.lane.b32.xlu0 %v736, 127
      %v745 = vpop.permute.xlu0 %744
      %v746 = vsel %vm351, %v741, %v743
      %v747 = vsel %vm351, %v743, %v745
      %751 = vrot.lane.b32.xlu0 %v734, 126
      %v752 = vpop.permute.xlu0 %751
      %753 = vrot.lane.b32.xlu0 %v735, 126
      %v754 = vpop.permute.xlu0 %753
      %755 = vrot.lane.b32.xlu0 %v736, 126
      %v756 = vpop.permute.xlu0 %755
      %v757 = vsel %vm360, %v752, %v754
      %v758 = vsel %vm360, %v754, %v756
      %762 = vrot.lane.b32.xlu0 %v734, 110
      %v763 = vpop.permute.xlu0 %762
      %764 = vrot.lane.b32.xlu0 %v735, 110
      %v765 = vpop.permute.xlu0 %764
      %766 = vrot.lane.b32.xlu0 %v736, 110
      %v767 = vpop.permute.xlu0 %766
      %v768 = vsel %vm369, %v763, %v765
      %v769 = vsel %vm369, %v765, %v767
      %773 = vrot.lane.b32.xlu0 %v734, 109
      %v774 = vpop.permute.xlu0 %773
      %775 = vrot.lane.b32.xlu0 %v735, 109
      %v776 = vpop.permute.xlu0 %775
      %777 = vrot.lane.b32.xlu0 %v736, 109
      %v778 = vpop.permute.xlu0 %777
      %v779 = vsel %vm378, %v774, %v776
      %v780 = vsel %vm378, %v776, %v778
      %784 = vrot.lane.b32.xlu0 %v734, 108
      %v785 = vpop.permute.xlu0 %784
      %786 = vrot.lane.b32.xlu0 %v735, 108
      %v787 = vpop.permute.xlu0 %786
      %788 = vrot.lane.b32.xlu0 %v736, 108
      %v789 = vpop.permute.xlu0 %788
      %v790 = vsel %vm387, %v785, %v787
      %v791 = vsel %vm387, %v787, %v789
      %795 = vrot.lane.b32.xlu0 %v734, 92
      %v796 = vpop.permute.xlu0 %795
      %797 = vrot.lane.b32.xlu0 %v735, 92
      %v798 = vpop.permute.xlu0 %797
      %799 = vrot.lane.b32.xlu0 %v736, 92
      %v800 = vpop.permute.xlu0 %799
      %v801 = vsel %vm396, %v796, %v798
      %v802 = vsel %vm396, %v798, %v800
      %806 = vrot.lane.b32.xlu0 %v734, 91
      %v807 = vpop.permute.xlu0 %806
      %808 = vrot.lane.b32.xlu0 %v735, 91
      %v809 = vpop.permute.xlu0 %808
      %810 = vrot.lane.b32.xlu0 %v736, 91
      %v811 = vpop.permute.xlu0 %810
      %v812 = vsel %vm405, %v807, %v809
      %v813 = vsel %vm405, %v809, %v811
      %817 = vrot.lane.b32.xlu0 %v734, 90
      %v818 = vpop.permute.xlu0 %817
      %819 = vrot.lane.b32.xlu0 %v735, 90
      %v820 = vpop.permute.xlu0 %819
      %821 = vrot.lane.b32.xlu0 %v736, 90
      %v822 = vpop.permute.xlu0 %821
      %v823 = vsel %vm414, %v818, %v820
      %v824 = vsel %vm414, %v820, %v822
      %v828 = vld [vmem:[%s5] sm:$0xff]
      %v829 = vld [vmem:[%s5 + $0x8] sm:$0xff]
      %v832 = vunpack.c.l.b16 %v828
      %v833 = vunpack.c.h.b16 %v828
      %v834 = vunpack.c.l.b16 %v829
      %v835 = vunpack.c.h.b16 %v829
      %v836 = vpack.c.b16 %v834, %v832
      %v837 = vpack.c.b16 %v835, %v833
      %vm839 = vcmask 130048
      %v841 = vsel %vm839, %v837, 0
      %843 = vmatprep.subr.bf16.mxu0 %v735
      %844 = vmatpush1.bf16.msra.mxu0 %v734
      %845 = vmatprep.subr.bf16.mxu0 %v747
      %846 = vmatpush1.bf16.msra.mxu0 %v746
      %847 = vmatprep.subr.bf16.mxu0 %v758
      %848 = vmatpush1.bf16.msra.mxu0 %v757
      %849 = vmatprep.subr.bf16.mxu0 %v769
      %850 = vmatpush1.bf16.msra.mxu0 %v768
      %851 = vmatprep.subr.bf16.mxu0 %v780
      %852 = vmatpush1.bf16.msra.mxu0 %v779
      %853 = vmatprep.subr.bf16.mxu0 %v791
      %854 = vmatpush1.bf16.msra.mxu0 %v790
      %855 = vmatprep.subr.bf16.mxu0 %v802
      %856 = vmatpush1.bf16.msra.mxu0 %v801
      %857 = vmatprep.subr.bf16.mxu0 %v813
      %858 = vmatpush1.bf16.msra.mxu0 %v812
      %859 = vmatprep.subr.bf16.mxu0 %v824
      %860 = vmatpush1.bf16.msra.mxu0 %v823
      %861 = vmatprep.subr.bf16.mxu0 0
      %862 = vmatpush1.bf16.msra.mxu0 0
      %863 = vmatprep.subr.bf16.mxu0 0
      %864 = vmatpush1.bf16.msra.mxu0 0
      %865 = vmatprep.subr.bf16.mxu0 0
      %866 = vmatpush1.bf16.msra.mxu0 0
      %867 = vmatprep.subr.bf16.mxu0 0
      %868 = vmatpush1.bf16.msra.mxu0 0
      %869 = vmatprep.subr.bf16.mxu0 0
      %870 = vmatpush1.bf16.msra.mxu0 0
      %871 = vmatprep.subr.bf16.mxu0 0
      %872 = vmatpush1.bf16.msra.mxu0 0
      %873 = vmatprep.subr.bf16.mxu0 0
      %874 = vmatpush1.bf16.msra.mxu0 0
      %875 = vmatprep.mubr.bf16.mxu0 %v841
      %876 = vmatmul.mubr.bf16.gmra.mrb[0].mxu0 %v836
      %v877 = vpop.f32.mrb[0].mxu0
      %v878 = vadd.f32 0.0, %v877
      %v879 = vpop.f32.mrb[0].mxu0
      %v880 = vadd.f32 0.0, %v879
      %v881 = vpop.f32.mrb[0].mxu0
      %v882 = vadd.f32 0.0, %v881
      %v883 = vpop.f32.mrb[0].mxu0
      %v884 = vadd.f32 0.0, %v883
      %885 = vdwg.mxu0
      %886 = vmatprep.subr.bf16.mxu0 0
      %887 = vmatpush1.bf16.msra.mxu0 %v736
      %888 = vmatprep.subr.bf16.mxu0 0
      %889 = vmatpush1.bf16.msra.mxu0 %v745
      %890 = vmatprep.subr.bf16.mxu0 0
      %891 = vmatpush1.bf16.msra.mxu0 %v756
      %892 = vmatprep.subr.bf16.mxu0 0
      %893 = vmatpush1.bf16.msra.mxu0 %v767
      %894 = vmatprep.subr.bf16.mxu0 0
      %895 = vmatpush1.bf16.msra.mxu0 %v778
      %896 = vmatprep.subr.bf16.mxu0 0
      %897 = vmatpush1.bf16.msra.mxu0 %v789
      %898 = vmatprep.subr.bf16.mxu0 0
      %899 = vmatpush1.bf16.msra.mxu0 %v800
      %900 = vmatprep.subr.bf16.mxu0 0
      %901 = vmatpush1.bf16.msra.mxu0 %v811
      %902 = vmatprep.subr.bf16.mxu0 0
      %903 = vmatpush1.bf16.msra.mxu0 %v822
      %904 = vmatprep.subr.bf16.mxu0 0
      %905 = vmatpush1.bf16.msra.mxu0 0
      %906 = vmatprep.subr.bf16.mxu0 0
      %907 = vmatpush1.bf16.msra.mxu0 0
      %908 = vmatprep.subr.bf16.mxu0 0
      %909 = vmatpush1.bf16.msra.mxu0 0
      %910 = vmatprep.subr.bf16.mxu0 0
      %911 = vmatpush1.bf16.msra.mxu0 0
      %912 = vmatprep.subr.bf16.mxu0 0
      %913 = vmatpush1.bf16.msra.mxu0 0
      %914 = vmatprep.subr.bf16.mxu0 0
      %915 = vmatpush1.bf16.msra.mxu0 0
      %916 = vmatprep.subr.bf16.mxu0 0
      %917 = vmatpush1.bf16.msra.mxu0 0
      %918 = vmatprep.mubr.bf16.mxu0 %v841
      %919 = vmatmul.mubr.bf16.gmra.mrb[0].mxu0 %v836
      %v920 = vpop.f32.mrb[0].mxu0
      %v921 = vadd.f32 0.0, %v920
      %v922 = vpop.f32.mrb[0].mxu0
      %v923 = vpop.f32.mrb[0].mxu0
      %v924 = vadd.f32 0.0, %v923
      %v925 = vpop.f32.mrb[0].mxu0
      %926 = vdwg.mxu0
      %v927 = vmul.f32 %v878, %v574
      %v928 = vmul.f32 %v880, %v578
      %v929 = vmul.f32 %v921, %v582
      %v930 = vmul.f32 %v882, %v574
      %v931 = vmul.f32 %v884, %v578
      %v932 = vmul.f32 %v924, %v582
      %v933 = vadd.f32 %v927, %v928
      %v934 = vsel %vm593, %v929, 0.0
      %v935 = vadd.f32 %v933, %v934
      %v936 = vadd.f32 %v935, %v930
      %v937 = vadd.f32 %v936, %v931
      %v938 = vsel %vm593, %v932, 0.0
      %v939 = vadd.f32 %v937, %v938
      %940 = vadd.xlane.f32.xlu0 %v939
      %v941 = vpop.xlane.xlu0 %940
      %v942 = vrot.slane %v941, 4
      %v943 = vadd.f32 %v941, %v942
      %v944 = vrot.slane %v943, 2
      %v945 = vadd.f32 %v943, %v944
      %v946 = vrot.slane %v945, 1
      %v947 = vadd.f32 %v945, %v946
      %s948 = vtos %v947
      %s949 = smul.f32 %s948, 0.00024414063
      %v950 = vmul.f32 %v878, %v878
      %v951 = vmul.f32 %v880, %v880
      %v952 = vmul.f32 %v921, %v921
      %v953 = vmul.f32 %v882, %v882
      %v954 = vmul.f32 %v884, %v884
      %v955 = vmul.f32 %v924, %v924
      %v956 = vmul.f32 %v950, %v574
      %v957 = vmul.f32 %v951, %v578
      %v958 = vmul.f32 %v952, %v582
      %v959 = vmul.f32 %v953, %v574
      %v960 = vmul.f32 %v954, %v578
      %v961 = vmul.f32 %v955, %v582
      %v962 = vadd.f32 %v956, %v957
      %v963 = vsel %vm593, %v958, 0.0
      %v964 = vadd.f32 %v962, %v963
      %v965 = vadd.f32 %v964, %v959
      %v966 = vadd.f32 %v965, %v960
      %v967 = vsel %vm593, %v961, 0.0
      %v968 = vadd.f32 %v966, %v967
      %969 = vadd.xlane.f32.xlu0 %v968
      %v970 = vpop.xlane.xlu0 %969
      %v971 = vrot.slane %v970, 4
      %v972 = vadd.f32 %v970, %v971
      %v973 = vrot.slane %v972, 2
      %v974 = vadd.f32 %v972, %v973
      %v975 = vrot.slane %v974, 1
      %v976 = vadd.f32 %v974, %v975
      %s977 = vtos %v976
      %s978 = smul.f32 %s977, 0.00024414063
      %s979 = smul.f32 %s949, %s949
      %s980 = ssub.f32 %s978, %s979
      %v981 = vstv %s949
      %v982 = vsub.f32 %v878, %v981
      %v983 = vsub.f32 %v880, %v981
      %v984 = vsub.f32 %v921, %v981
      %v985 = vsub.f32 %v882, %v981
      %v986 = vsub.f32 %v884, %v981
      %v987 = vsub.f32 %v924, %v981
      %s988 = sadd.f32 %s980, 1e-05
      %v989 = vstv %s988
      %v990 = vrsqrt.pop %v989
      %s991 = vtos %v990
      %v992 = vstv %s991
      %v993 = vmul.f32 %v982, %v992
      %v994 = vmul.f32 %v983, %v992
      %v995 = vmul.f32 %v984, %v992
      %v996 = vmul.f32 %v985, %v992
      %v997 = vmul.f32 %v986, %v992
      %v998 = vmul.f32 %v987, %v992
      %v999 = vld [vmem:[%s6] sm:$0xff]
      %v1000 = vld [vmem:[%s6 + $0x8] sm:$0xff]
      %1002 = vset.pattern.permute.xlu0 0
      %1003 = vperm.xlu0 %1002, %v999
      %v1004 = vpop.permute.xlu0 %1003
      %1007 = vset.pattern.permute.xlu0 0
      %1008 = vperm.xlu0 %1007, %v1000
      %v1009 = vpop.permute.xlu0 %1008
      %v1011 = vmul.f32 %v993, %v1004
      %v1012 = vmul.f32 %v994, %v1004
      %v1013 = vmul.f32 %v995, %v1004
      %v1014 = vmul.f32 %v996, %v1009
      %v1015 = vmul.f32 %v997, %v1009
      %v1016 = vmul.f32 %v998, %v1009
      %v1017 = vld [vmem:[%s7] sm:$0xff]
      %v1018 = vld [vmem:[%s7 + $0x8] sm:$0xff]
      %1020 = vset.pattern.permute.xlu0 0
      %1021 = vperm.xlu0 %1020, %v1017
      %v1022 = vpop.permute.xlu0 %1021
      %1025 = vset.pattern.permute.xlu0 0
      %1026 = vperm.xlu0 %1025, %v1018
      %v1027 = vpop.permute.xlu0 %1026
      %v1029 = vadd.f32 %v1011, %v1022
      %v1030 = vadd.f32 %v1012, %v1022
      %v1031 = vadd.f32 %v1013, %v1022
      %v1032 = vadd.f32 %v1014, %v1027
      %v1033 = vadd.f32 %v1015, %v1027
      %v1034 = vadd.f32 %v1016, %v1027
      %v1035 = vld [vmem:[%s8] sm:$0xf]
      %v1036 = vld [vmem:[%s8 + $0x4] sm:$0xf]
      %v1039 = vunpack.c.l.b16 %v1035
      %v1040 = vunpack.c.l.b16 %v1036
      %v1041 = vpack.c.b16 %v1040, %v1039
      %vm1042 = vcmask 64512
      %v1044 = vsel %vm1042, %v1041, 0
      %v1046 = vsel %vm417, %v379, 0
      %v1048 = vsel %vm417, %v380, 0
      %v1050 = vsel %vm417, %v377, 0
      %1052 = vmatprep.subr.bf16.mxu0 %v1048
      %1053 = vmatpush1.bf16.msra.mxu0 %v1046
      %1054 = vmatprep.subr.bf16.mxu0 0
      %1055 = vmatpush1.bf16.msra.mxu0 0
      %1056 = vmatprep.subr.bf16.mxu0 0
      %1057 = vmatpush1.bf16.msra.mxu0 0
      %1058 = vmatprep.subr.bf16.mxu0 0
      %1059 = vmatpush1.bf16.msra.mxu0 0
      %1060 = vmatprep.subr.bf16.mxu0 0
      %1061 = vmatpush1.bf16.msra.mxu0 0
      %1062 = vmatprep.subr.bf16.mxu0 0
      %1063 = vmatpush1.bf16.msra.mxu0 0
      %1064 = vmatprep.subr.bf16.mxu0 0
      %1065 = vmatpush1.bf16.msra.mxu0 0
      %1066 = vmatprep.subr.bf16.mxu0 0
      %1067 = vmatpush1.bf16.msra.mxu0 0
      %1068 = vmatprep.subr.bf16.mxu0 0
      %1069 = vmatpush1.bf16.msra.mxu0 0
      %1070 = vmatprep.subr.bf16.mxu0 0
      %1071 = vmatpush1.bf16.msra.mxu0 0
      %1072 = vmatprep.subr.bf16.mxu0 0
      %1073 = vmatpush1.bf16.msra.mxu0 0
      %1074 = vmatprep.subr.bf16.mxu0 0
      %1075 = vmatpush1.bf16.msra.mxu0 0
      %1076 = vmatprep.subr.bf16.mxu0 0
      %1077 = vmatpush1.bf16.msra.mxu0 0
      %1078 = vmatprep.subr.bf16.mxu0 0
      %1079 = vmatpush1.bf16.msra.mxu0 0
      %1080 = vmatprep.subr.bf16.mxu0 0
      %1081 = vmatpush1.bf16.msra.mxu0 0
      %1082 = vmatprep.subr.bf16.mxu0 0
      %1083 = vmatpush1.bf16.msra.mxu0 0
      %1084 = vmatprep.mubr.bf16.mxu0 0
      %1085 = vmatmul.mubr.bf16.gmra.mrb[0].mxu0 %v1044
      %v1086 = vpop.f32.mrb[0].mxu0
      %v1087 = vadd.f32 0.0, %v1086
      %v1088 = vpop.f32.mrb[0].mxu0
      %v1089 = vadd.f32 0.0, %v1088
      %v1090 = vpop.f32.mrb[0].mxu0
      %v1091 = vadd.f32 0.0, %v1090
      %v1092 = vpop.f32.mrb[0].mxu0
      %v1093 = vadd.f32 0.0, %v1092
      %1094 = vdwg.mxu0
      %1095 = vmatprep.subr.bf16.mxu0 0
      %1096 = vmatpush1.bf16.msra.mxu0 %v1050
      %1097 = vmatprep.subr.bf16.mxu0 0
      %1098 = vmatpush1.bf16.msra.mxu0 0
      %1099 = vmatprep.subr.bf16.mxu0 0
      %1100 = vmatpush1.bf16.msra.mxu0 0
      %1101 = vmatprep.subr.bf16.mxu0 0
      %1102 = vmatpush1.bf16.msra.mxu0 0
      %1103 = vmatprep.subr.bf16.mxu0 0
      %1104 = vmatpush1.bf16.msra.mxu0 0
      %1105 = vmatprep.subr.bf16.mxu0 0
      %1106 = vmatpush1.bf16.msra.mxu0 0
      %1107 = vmatprep.subr.bf16.mxu0 0
      %1108 = vmatpush1.bf16.msra.mxu0 0
      %1109 = vmatprep.subr.bf16.mxu0 0
      %1110 = vmatpush1.bf16.msra.mxu0 0
      %1111 = vmatprep.subr.bf16.mxu0 0
      %1112 = vmatpush1.bf16.msra.mxu0 0
      %1113 = vmatprep.subr.bf16.mxu0 0
      %1114 = vmatpush1.bf16.msra.mxu0 0
      %1115 = vmatprep.subr.bf16.mxu0 0
      %1116 = vmatpush1.bf16.msra.mxu0 0
      %1117 = vmatprep.subr.bf16.mxu0 0
      %1118 = vmatpush1.bf16.msra.mxu0 0
      %1119 = vmatprep.subr.bf16.mxu0 0
      %1120 = vmatpush1.bf16.msra.mxu0 0
      %1121 = vmatprep.subr.bf16.mxu0 0
      %1122 = vmatpush1.bf16.msra.mxu0 0
      %1123 = vmatprep.subr.bf16.mxu0 0
      %1124 = vmatpush1.bf16.msra.mxu0 0
      %1125 = vmatprep.subr.bf16.mxu0 0
      %1126 = vmatpush1.bf16.msra.mxu0 0
      %1127 = vmatprep.mubr.bf16.mxu0 0
      %1128 = vmatmul.mubr.bf16.gmra.mrb[0].mxu0 %v1044
      %v1129 = vpop.f32.mrb[0].mxu0
      %v1130 = vadd.f32 0.0, %v1129
      %v1131 = vpop.f32.mrb[0].mxu0
      %v1132 = vpop.f32.mrb[0].mxu0
      %v1133 = vadd.f32 0.0, %v1132
      %v1134 = vpop.f32.mrb[0].mxu0
      %1135 = vdwg.mxu0
      %v1136 = vadd.f32 %v1029, %v1087
      %v1137 = vadd.f32 %v1030, %v1089
      %v1138 = vadd.f32 %v1031, %v1130
      %v1139 = vadd.f32 %v1032, %v1091
      %v1140 = vadd.f32 %v1033, %v1093
      %v1141 = vadd.f32 %v1034, %v1133
      %v1142 = vmax.f32 %v1136, 0.0
      %v1143 = vmax.f32 %v1137, 0.0
      %v1144 = vmax.f32 %v1138, 0.0
      %v1145 = vmax.f32 %v1139, 0.0
      %v1146 = vmax.f32 %v1140, 0.0
      %v1147 = vmax.f32 %v1141, 0.0
      %1148 = vst [vmem:[%s332] sm:$0xff] %v1142
      %1149 = vst [vmem:[%s332 + $0x8] sm:$0xff] %v1143
      %1150 = vst.msk [vmem:[%s332 + $0x10] sm:$0xff] %vm593, %v1144
      %1151 = vst [vmem:[%s332 + $0x18] sm:$0xff] %v1145
      %1152 = vst [vmem:[%s332 + $0x20] sm:$0xff] %v1146
      %1153 = vst.msk [vmem:[%s332 + $0x28] sm:$0xff] %vm593, %v1147
      %p1154 = scmp.lt.s32.totalorder %s20, 1
      %s1155 = scalar_select %p1154, %s20, 1
      %s1156 = smul.addr %s1155, 6
      %s1157 = smul.addr %s1156, 8
      %s1158 = scalar_lea.vmem %s9, %s1157
      // Predicated region
      $region57: #{up_block_forward.1} parent=55 // pred_check
        %p1159 = pneg %p232
      $region58: #{up_block_forward.1} parent=55 // pred_check_branch
        %1161 = sbr.rel (%p1159) target = $region60
      $region59: #{up_block_forward.1} parent=55 // pred_region
        _
      $region60: #{up_block_forward.1} parent=55 // pred_fallthru
        _
    $region56: #{up_block_forward.1} parent=5 // pred_fallthru
      _
    %p1162 = scmp.le.s32.totalorder 2, %s15
    // Predicated region
    $region61: #{up_block_forward.1} parent=5 // pred_check
      %p1163 = pneg %p1162
    $region62: #{up_block_forward.1} parent=5 // pred_check_branch
      %1165 = sbr.rel (%p1163) target = $region64
    $region63: #{up_block_forward.1} parent=5 // pred_region
      %s1166 = ssub.s32 %s15, 2
      // Predicated region
      $region65: #{up_block_forward.1} parent=63 // pred_check
        %p1167 = pneg %p238
      $region66: #{up_block_forward.1} parent=63 // pred_check_branch
        %1169 = sbr.rel (%p1167) target = $region68
      $region67: #{up_block_forward.1} parent=63 // pred_region
        %p1170 = scmp.lt.s32.totalorder %s21, 1
        %s1171 = scalar_select %p1170, %s21, 1
        %s1172 = smul.addr %s1171, 6
        %s1173 = smul.addr %s1172, 8
        %s1174 = scalar_lea.vmem %s9, %s1173
      $region68: #{up_block_forward.1} parent=63 // pred_fallthru
        _
    $region64: #{up_block_forward.1} parent=5 // pred_fallthru
      _
  $region6: #{up_block_forward.1} parent=0 // loop_footer
    %s19 = sadd.s32 1, %s15
  $region7: #{up_block_forward.1} parent=0 // loop_footer_branch
    %14 = sbr.rel target = $region3
  $region8: #{up_block_forward.1} parent=0 // loop_exit
    _

</llo_original>
